<compile_context>
chip_gen: v7x
topology: tpu7x:2x2x1
jax: 0.10.0
libtpu: 0.0.40
codegen_flags: <defaults>
</compile_context>

<pallas_src>
import functools

import jax
import jax.numpy as jnp
from jax.experimental import pallas as pl
from jax.experimental.pallas import tpu as pltpu


HIDDEN = 32  # fixed by the module: self.fc = nn.Linear(input_dim, 32)


def _round_up(x, m):
    return (x + m - 1) // m * m


# --------------------------------------------------------------------------- #
# Kernel
# --------------------------------------------------------------------------- #
def _mog_decoder_kernel(
    xT_ref,                    # (din, TB)       batch on lanes
    wT_ref,                    # (n_out, din)    combined weight, transposed
    bT_ref,                    # (n_out, 1)      combined bias, transposed
    out_ref,                   # (n_out, TB)     rows = [pi | sigma | mu]
    *, num_heads, num_gaussians, output_dim,
):
    hg = num_heads * num_gaussians
    hgd = hg * output_dim

    # Single fused projection: (n_out, TB) = W_comb^T @ x^T + b_comb^T.
    z = (
        jnp.dot(wT_ref[...], xT_ref[...], preferred_element_type=jnp.float32)
        + bT_ref[...]
    )

    # pi: softmax over the G gaussian rows of each head.  Rows are sublanes,
    # batch is lane-dense, so the reductions are tiny cross-sublane ops and
    # there are no lane shuffles / concats.  Static, tiny trip count.
    for head in range(num_heads):
        lo = head * num_gaussians
        logits = z[lo:lo + num_gaussians, :]                    # (G, TB)
        m = jnp.max(logits, axis=0, keepdims=True)
        e = jnp.exp(logits - m)
        inv = pl.reciprocal(jnp.sum(e, axis=0, keepdims=True), approx=True)
        out_ref[lo:lo + num_gaussians, :] = e * inv

    # sigma: ELU(exp(z)) == exp(z) since exp(z) > 0; keep the +1e-15.
    out_ref[hg:hg + hgd, :] = jnp.exp(z[hg:hg + hgd, :]) + 1e-15

    # mu: identity.
    out_ref[hg + hgd:, :] = z[hg + hgd:, :]


# --------------------------------------------------------------------------- #
# Parameter fusion (one-time, outside the kernel)
# --------------------------------------------------------------------------- #
def fuse_head_params(params):
    """Fold fc + the three head linears into one (din x n_out) projection.

    Eval-mode dropout is identity and there is no nonlinearity between fc and
    the heads, so x @ W_fc @ W_heads == (x @ W_comb) exactly up to f32 rounding.
    Stored pre-transposed for the lane-dense (batch-on-lanes) kernel layout.
    """
    w_heads = jnp.concatenate(
        [params["w_pi"], params["w_sigma"], params["w_mu"]], axis=1
    )                                                     # (32, n_out)
    b_heads = jnp.concatenate(
        [params["b_pi"], params["b_sigma"], params["b_mu"]], axis=1
    )                                                     # (1, n_out)
    w_comb = params["w_fc"] @ w_heads                     # (din, n_out)
    b_comb = params["b_fc"] @ w_heads + b_heads           # (1, n_out)
    return {
        "wT": jnp.asarray(w_comb.T, jnp.float32),         # (n_out, din)
        "bT": jnp.asarray(b_comb.T, jnp.float32),         # (n_out, 1)
    }


# --------------------------------------------------------------------------- #
# Wrapper
# --------------------------------------------------------------------------- #
def _choose_batch_tile(B, din, n_out, batch_tile_cap):
    """Batch tile from a conservative VMEM budget (double-buffered in/out)."""
    per_row_bytes = 4 * (din + n_out)
    vmem_budget = 12 * 1024 * 1024            # fits v5e's 16 MiB scoped default
    tb_vmem = max(128, (vmem_budget // (2 * per_row_bytes)) // 128 * 128)
    tb = min(batch_tile_cap, tb_vmem)
    # Keep >= 2 grid steps when B is big enough so v7x's 2 TCs both get work.
    half = _round_up(pl.cdiv(B, 2), 128)
    tb = min(tb, half)
    if B <= tb or B < 2 * 128:
        return B                              # one full-extent tile (always legal)
    return tb


def mog_decoder_forward(
    fused_params, x_tuple, *, num_heads, num_gaussians, output_dim,
    batch_tile=32768,
):
    """JAX wrapper mirroring ContrastiveGNNMixureDecoderMultiHead.forward."""
    concat_embed, contrastive_loss = x_tuple
    del contrastive_loss  # stashed on the torch module; not part of the output

    B, din = concat_embed.shape
    HG = num_heads * num_gaussians
    HGD = HG * output_dim
    n_out = HG + 2 * HGD

    # Lane-dense input: batch on the lane axis (layout plumbing, not compute).
    xT = jnp.asarray(concat_embed, jnp.float32).T         # (din, B)

    tb = _choose_batch_tile(B, din, n_out, batch_tile)
    grid = (pl.cdiv(B, tb),)

    kernel = functools.partial(
        _mog_decoder_kernel,
        num_heads=num_heads,
        num_gaussians=num_gaussians,
        output_dim=output_dim,
    )

    cost = pl.CostEstimate(
        flops=2 * B * din * n_out,
        transcendentals=B * (HG + HGD),
        bytes_accessed=4 * (B * din + n_out * din + n_out + B * n_out),
    )

    out_t = pl.pallas_call(
        kernel,
        out_shape=jax.ShapeDtypeStruct((n_out, B), jnp.float32),
        grid_spec=pltpu.PrefetchScalarGridSpec(
            num_scalar_prefetch=0,
            grid=grid,
            in_specs=[
                pl.BlockSpec((din, tb), lambda i: (0, i)),     # xT: tiled over batch
                pl.BlockSpec((n_out, din), lambda i: (0, 0)),  # wT: resident
                pl.BlockSpec((n_out, 1), lambda i: (0, 0)),    # bT: resident
            ],
            out_specs=pl.BlockSpec((n_out, tb), lambda i: (0, i)),
        ),
        compiler_params=pltpu.CompilerParams(
            dimension_semantics=("parallel",),   # batch axis -> both TCs on v7x
            vmem_limit_bytes=32 * 1024 * 1024,   # safe on every generation
        ),
        cost_estimate=cost,
    )(xT, fused_params["wT"], fused_params["bT"])

    # Wrapper-side slicing / transpose / reshape back to the module's shapes.
    pi = out_t[:HG, :].T.reshape(B, num_heads, num_gaussians)
    sigma = out_t[HG:HG + HGD, :].T.reshape(B, num_heads, num_gaussians, output_dim)
    mu = out_t[HG + HGD:, :].T.reshape(B, num_heads, num_gaussians, output_dim)
    return pi, mu, sigma


# --------------------------------------------------------------------------- #
# Parameter init (torch-equivalent shapes; weights stored as [in, out])
# --------------------------------------------------------------------------- #
def init_params(key, input_dim, output_dim, num_gaussians, num_heads):
    kfc_w, kfc_b, kpi, ksig, kmu = jax.random.split(key, 5)

    def xavier_uniform(k, fan_in, fan_out):
        bound = jnp.sqrt(6.0 / (fan_in + fan_out))
        return jax.random.uniform(k, (fan_in, fan_out), jnp.float32, -bound, bound)

    def xavier_normal(k, fan_in, fan_out):
        std = jnp.sqrt(2.0 / (fan_in + fan_out))
        return std * jax.random.normal(k, (fan_in, fan_out), jnp.float32)

    HG = num_heads * num_gaussians
    HGD = HG * output_dim

    fc_bound = 1.0 / jnp.sqrt(jnp.float32(input_dim))
    return {
        "w_fc": jax.random.uniform(
            kfc_w, (input_dim, HIDDEN), jnp.float32, -fc_bound, fc_bound
        ),
        "b_fc": jax.random.uniform(
            kfc_b, (1, HIDDEN), jnp.float32, -fc_bound, fc_bound
        ),
        "w_pi": xavier_uniform(kpi, HIDDEN, HG),
        "b_pi": jnp.zeros((1, HG), jnp.float32),
        "w_sigma": xavier_normal(ksig, HIDDEN, HGD),
        "b_sigma": jnp.zeros((1, HGD), jnp.float32),
        "w_mu": xavier_normal(kmu, HIDDEN, HGD),
        "b_mu": jnp.zeros((1, HGD), jnp.float32),
    }


def _reference_forward(params, x, num_heads, num_gaussians, output_dim):
    """Plain-JAX reference mirroring the literal PyTorch op sequence."""
    B = x.shape[0]
    h = x @ params["w_fc"] + params["b_fc"]
    pi = jax.nn.softmax(
        (h @ params["w_pi"] + params["b_pi"]).reshape(B, num_heads, num_gaussians),
        axis=2,
    )
    s = jnp.exp(h @ params["w_sigma"] + params["b_sigma"]).reshape(
        B, num_heads, num_gaussians, output_dim
    )
    sigma = jnp.where(s > 0, s, jnp.exp(s) - 1.0) + 1e-15  # literal ELU(exp(.))
    mu = (h @ params["w_mu"] + params["b_mu"]).reshape(
        B, num_heads, num_gaussians, output_dim
    )
    return pi, mu, sigma


if __name__ == "__main__":
    INPUT_DIM = 16
    OUTPUT_DIM = 2
    NUM_GAUSSIANS = 2
    NUM_HEADS = 1
    BATCH = 8

    key = jax.random.PRNGKey(0)
    kparam, kx = jax.random.split(key)

    params = init_params(kparam, INPUT_DIM, OUTPUT_DIM, NUM_GAUSSIANS, NUM_HEADS)
    fused = fuse_head_params(params)
    concat_embed = jax.random.normal(kx, (BATCH, INPUT_DIM), jnp.float32)
    contrastive_loss = jnp.float32(0.123)  # second element of the forward input tuple

    fwd = functools.partial(
        mog_decoder_forward,
        num_heads=NUM_HEADS,
        num_gaussians=NUM_GAUSSIANS,
        output_dim=OUTPUT_DIM,
    )

    pi, mu, sigma = fwd(fused, (concat_embed, contrastive_loss))
    jax.block_until_ready((pi, mu, sigma))

    # Correctness check against the pure-JAX (un-fused, literal) reference.
    pi_r, mu_r, sigma_r = _reference_forward(
        params, concat_embed, NUM_HEADS, NUM_GAUSSIANS, OUTPUT_DIM
    )
    assert pi.shape == (BATCH, NUM_HEADS, NUM_GAUSSIANS)
    assert mu.shape == (BATCH, NUM_HEADS, NUM_GAUSSIANS, OUTPUT_DIM)
    assert sigma.shape == (BATCH, NUM_HEADS, NUM_GAUSSIANS, OUTPUT_DIM)
    # pi uses the approx EUP reciprocal; mu/sigma differ only by the f32
    # rounding of the fc+heads algebraic fusion.
    assert jnp.allclose(pi, pi_r, atol=2e-3, rtol=2e-3)
    assert jnp.allclose(mu, mu_r, atol=1e-4, rtol=1e-4)
    assert jnp.allclose(sigma, sigma_r, atol=1e-4, rtol=1e-4)

    print("KERNEL_OK")
</pallas_src>

<mosaic_0001>
module attributes {stable_mosaic.version = 11 : i64} {
  func.func @_mog_decoder_kernel(%arg0: i32, %arg1: memref<16x8xf32, #tpu.memory_space<vmem>>, %arg2: memref<10x16xf32, #tpu.memory_space<vmem>>, %arg3: memref<10x1xf32, #tpu.memory_space<vmem>>, %arg4: memref<10x8xf32, #tpu.memory_space<vmem>>) attributes {dimension_semantics = [#tpu.dimension_semantics<parallel>], iteration_bounds = array<i64: 1>, scalar_prefetch = 0 : i64, scratch_operands = 0 : i64, tpu.core_type = #tpu.core_type<tc>, window_params = [{transform_indices = @transform_0, window_bounds = array<i64: 16, 8>}, {pipeline_mode = #tpu.pipeline_mode<synchronous>, transform_indices = @transform_1, window_bounds = array<i64: 10, 16>}, {pipeline_mode = #tpu.pipeline_mode<synchronous>, transform_indices = @transform_2, window_bounds = array<i64: 10, 1>}, {transform_indices = @transform_3, window_bounds = array<i64: 10, 8>}]} {
    %c0 = arith.constant 0 : index
    %c0_0 = arith.constant 0 : index
    %0 = vector.load %arg2[%c0, %c0_0] : memref<10x16xf32, #tpu.memory_space<vmem>>, vector<10x16xf32>
    %c0_1 = arith.constant 0 : index
    %c0_2 = arith.constant 0 : index
    %1 = vector.load %arg1[%c0_1, %c0_2] : memref<16x8xf32, #tpu.memory_space<vmem>>, vector<16x8xf32>
    %cst = arith.constant dense<0.000000e+00> : vector<10x8xf32>
    %2 = tpu.matmul %0, %1, %cst {dimension_numbers = #tpu.dot_dimension_numbers<[1], [0], [0], [1], [0, 0, 1, 1], [], []>} : vector<10x16xf32>, vector<16x8xf32>, vector<10x8xf32> -> vector<10x8xf32>
    %c0_3 = arith.constant 0 : index
    %c0_4 = arith.constant 0 : index
    %3 = vector.load %arg3[%c0_3, %c0_4] : memref<10x1xf32, #tpu.memory_space<vmem>>, vector<10x1xf32>
    %4 = vector.broadcast %3 : vector<10x1xf32> to vector<10x8xf32>
    %5 = arith.addf %2, %4 : vector<10x8xf32>
    %6 = vector.extract_strided_slice %5 {offsets = [0, 0], sizes = [2, 8], strides = [1, 1]} : vector<10x8xf32> to vector<2x8xf32>
    %cst_5 = arith.constant dense<0xFF800000> : vector<8xf32>
    %7 = vector.multi_reduction <maximumf>, %6, %cst_5 [0] : vector<2x8xf32> to vector<8xf32>
    %8 = vector.shape_cast %7 : vector<8xf32> to vector<1x8xf32>
    %9 = vector.broadcast %8 : vector<1x8xf32> to vector<2x8xf32>
    %10 = arith.subf %6, %9 : vector<2x8xf32>
    %11 = math.exp %10 : vector<2x8xf32>
    %cst_6 = arith.constant dense<0.000000e+00> : vector<8xf32>
    %12 = vector.multi_reduction <add>, %11, %cst_6 [0] : vector<2x8xf32> to vector<8xf32>
    %13 = vector.shape_cast %12 : vector<8xf32> to vector<1x8xf32>
    %14 = tpu.reciprocal %13 {approx = true} : vector<1x8xf32> -> vector<1x8xf32>
    %15 = vector.broadcast %14 : vector<1x8xf32> to vector<2x8xf32>
    %16 = arith.mulf %11, %15 : vector<2x8xf32>
    %c0_7 = arith.constant 0 : index
    %c0_8 = arith.constant 0 : index
    %17 = vector.load %arg4[%c0_7, %c0_8] : memref<10x8xf32, #tpu.memory_space<vmem>>, vector<2x8xf32>
    tpu.vector_store %arg4[%c0_7, %c0_8], %16 {strides = array<i32>} : memref<10x8xf32, #tpu.memory_space<vmem>>, vector<2x8xf32>,
    %18 = vector.extract_strided_slice %5 {offsets = [2, 0], sizes = [4, 8], strides = [1, 1]} : vector<10x8xf32> to vector<4x8xf32>
    %19 = math.exp %18 : vector<4x8xf32>
    %cst_9 = arith.constant 1.000000e-15 : f32
    %20 = vector.broadcast %cst_9 : f32 to vector<4x8xf32>
    %21 = arith.addf %19, %20 : vector<4x8xf32>
    %c2 = arith.constant 2 : index
    %c0_10 = arith.constant 0 : index
    %22 = vector.load %arg4[%c2, %c0_10] : memref<10x8xf32, #tpu.memory_space<vmem>>, vector<4x8xf32>
    tpu.vector_store %arg4[%c2, %c0_10], %21 {strides = array<i32>} : memref<10x8xf32, #tpu.memory_space<vmem>>, vector<4x8xf32>,
    %23 = vector.extract_strided_slice %5 {offsets = [6, 0], sizes = [4, 8], strides = [1, 1]} : vector<10x8xf32> to vector<4x8xf32>
    %c6 = arith.constant 6 : index
    %c0_11 = arith.constant 0 : index
    %24 = vector.load %arg4[%c6, %c0_11] : memref<10x8xf32, #tpu.memory_space<vmem>>, vector<4x8xf32>
    tpu.vector_store %arg4[%c6, %c0_11], %23 {strides = array<i32>} : memref<10x8xf32, #tpu.memory_space<vmem>>, vector<4x8xf32>,
    return
  }
  func.func @transform_0(%arg0: i32) -> (i32, i32) {
    %c0_i32 = arith.constant 0 : i32
    %c0_i32_0 = arith.constant 0 : i32
    return %c0_i32, %arg0 : i32, i32
  }
  func.func @transform_1(%arg0: i32) -> (i32, i32) {
    %c0_i32 = arith.constant 0 : i32
    %c0_i32_0 = arith.constant 0 : i32
    %c0_i32_1 = arith.constant 0 : i32
    return %c0_i32, %c0_i32_0 : i32, i32
  }
  func.func @transform_2(%arg0: i32) -> (i32, i32) {
    %c0_i32 = arith.constant 0 : i32
    %c0_i32_0 = arith.constant 0 : i32
    %c0_i32_1 = arith.constant 0 : i32
    return %c0_i32, %c0_i32_0 : i32, i32
  }
  func.func @transform_3(%arg0: i32) -> (i32, i32) {
    %c0_i32 = arith.constant 0 : i32
    %c0_i32_0 = arith.constant 0 : i32
    return %c0_i32, %arg0 : i32, i32
  }
}

</mosaic_0001>

<llo_original>
// kernel: tpu_custom_call.1
$region0: #{tpu_custom_call.1}
  #allocation0 [shape = 'u32[]', space=smem, size = 0x4, offset = 0x4, fixed_abs, tag = 'smem constant byte address 0x4 - core index']
  #allocation1 [shape = 'u32[144,128]{1,0:T(1,128)}', space=vmem, size = 0x12000, scoped, tag = 'internal scratch']
  %s0 = inlined_call_operand.vmem [shape: f32[16,8], index: 0, kind: input, shape index: {}]
  %s1 = inlined_call_operand.vmem [shape: f32[10,16], index: 1, kind: input, shape index: {}]
  %s2 = inlined_call_operand.vmem [shape: f32[10,1], index: 2, kind: input, shape index: {}]
  %s3 = inlined_call_operand.vmem [shape: f32[10,8], index: 3, kind: output, shape index: {}]
  %s4 = sld [smem:[#allocation0]]
  $region22: #{tpu_custom_call.1} parent=0
    _
  %s6 = ssub.s32 1, %s4
  %s7 = scalar_select 0, %s6, %s4
  // Predicated region
  $region2: #{tpu_custom_call.1} parent=0 // pred_check
    _
  $region3: #{tpu_custom_call.1} parent=0 // pred_check_branch
    %9 = sbr.rel (0) target = $region5
  $region4: #{tpu_custom_call.1} parent=0 // pred_region
    _
  $region5: #{tpu_custom_call.1} parent=0 // pred_fallthru
    _
  // Predicated region
  $region6: #{tpu_custom_call.1} parent=0 // pred_check
    _
  $region7: #{tpu_custom_call.1} parent=0 // pred_check_branch
    %11 = sbr.rel (0) target = $region9
  $region8: #{tpu_custom_call.1} parent=0 // pred_region
    _
  $region9: #{tpu_custom_call.1} parent=0 // pred_fallthru
    _
  // Predicated region
  $region10: #{tpu_custom_call.1} parent=0 // pred_check
    _
  $region11: #{tpu_custom_call.1} parent=0 // pred_check_branch
    %13 = sbr.rel (0) target = $region13
  $region12: #{tpu_custom_call.1} parent=0 // pred_region
    _
  $region13: #{tpu_custom_call.1} parent=0 // pred_fallthru
    _
  %v14 = vld [vmem:[%s1] sm:$0xff]
  %v15 = vld [vmem:[%s1 + $0x8] sm:$0x3]
  %v16 = vld [vmem:[%s0] sm:$0xff]
  %v17 = vld [vmem:[%s0 + $0x8] sm:$0xff]
  %v18 = vld [vmem:[%s2] sm:$0xff]
  %v19 = vld [vmem:[%s2 + $0x8] sm:$0x3]
  %21 = vset.pattern.permute.xlu0 0
  %22 = vperm.xlu0 %21, %v18
  %v23 = vpop.permute.xlu0 %22
  %26 = vset.pattern.permute.xlu0 0
  %27 = vperm.xlu0 %26, %v19
  %v28 = vpop.permute.xlu0 %27
  %vm30 = vcmask 130048
  %v32 = vsel %vm30, %v14, 0
  %v35 = vsel %vm30, %v15, 0
  %37 = vmatprep.subr.mxu0 0.0
  %38 = vmatpush1.msra.mxu0 %v16
  %39 = vmatprep.subr.mxu0 0.0
  %40 = vmatpush1.msra.mxu0 %v17
  %41 = vmatprep.subr.mxu0 0.0
  %42 = vmatpush1.msra.mxu0 0.0
  %43 = vmatprep.subr.mxu0 0.0
  %44 = vmatpush1.msra.mxu0 0.0
  %45 = vmatprep.subr.mxu0 0.0
  %46 = vmatpush1.msra.mxu0 0.0
  %47 = vmatprep.subr.mxu0 0.0
  %48 = vmatpush1.msra.mxu0 0.0
  %49 = vmatprep.subr.mxu0 0.0
  %50 = vmatpush1.msra.mxu0 0.0
  %51 = vmatprep.subr.mxu0 0.0
  %52 = vmatpush1.msra.mxu0 0.0
  %53 = vmatprep.subr.mxu0 0.0
  %54 = vmatpush1.msra.mxu0 0.0
  %55 = vmatprep.subr.mxu0 0.0
  %56 = vmatpush1.msra.mxu0 0.0
  %57 = vmatprep.subr.mxu0 0.0
  %58 = vmatpush1.msra.mxu0 0.0
  %59 = vmatprep.subr.mxu0 0.0
  %60 = vmatpush1.msra.mxu0 0.0
  %61 = vmatprep.subr.mxu0 0.0
  %62 = vmatpush1.msra.mxu0 0.0
  %63 = vmatprep.subr.mxu0 0.0
  %64 = vmatpush1.msra.mxu0 0.0
  %65 = vmatprep.subr.mxu0 0.0
  %66 = vmatpush1.msra.mxu0 0.0
  %67 = vmatprep.subr.mxu0 0.0
  %68 = vmatpush1.msra.mxu0 0.0
  %69 = vmatprep.subr.mxu0 0.0
  %70 = vmatpush1.msra.mxu0 0.0
  %71 = vmatprep.subr.mxu0 0.0
  %72 = vmatpush1.msra.mxu0 0.0
  %73 = vmatprep.subr.mxu0 0.0
  %74 = vmatpush1.msra.mxu0 0.0
  %75 = vmatprep.subr.mxu0 0.0
  %76 = vmatpush1.msra.mxu0 0.0
  %77 = vmatprep.subr.mxu0 0.0
  %78 = vmatpush1.msra.mxu0 0.0
  %79 = vmatprep.subr.mxu0 0.0
  %80 = vmatpush1.msra.mxu0 0.0
  %81 = vmatprep.subr.mxu0 0.0
  %82 = vmatpush1.msra.mxu0 0.0
  %83 = vmatprep.subr.mxu0 0.0
  %84 = vmatpush1.msra.mxu0 0.0
  %85 = vmatprep.subr.mxu0 0.0
  %86 = vmatpush1.msra.mxu0 0.0
  %87 = vmatprep.subr.mxu0 0.0
  %88 = vmatpush1.msra.mxu0 0.0
  %89 = vmatprep.subr.mxu0 0.0
  %90 = vmatpush1.msra.mxu0 0.0
  %91 = vmatprep.subr.mxu0 0.0
  %92 = vmatpush1.msra.mxu0 0.0
  %93 = vmatprep.subr.mxu0 0.0
  %94 = vmatpush1.msra.mxu0 0.0
  %95 = vmatprep.subr.mxu0 0.0
  %96 = vmatpush1.msra.mxu0 0.0
  %97 = vmatprep.subr.mxu0 0.0
  %98 = vmatpush1.msra.mxu0 0.0
  %99 = vmatprep.subr.mxu0 0.0
  %100 = vmatpush1.msra.mxu0 0.0
  %101 = vmatprep.mubr.f32.mxu0 0.0
  %102 = vmatmul.mubr.f32.gmra.mrb[0].mxu0 %v32
  %v103 = vpop.f32.mrb[0].mxu0
  %v104 = vadd.f32 %v23, %v103
  %v105 = vpop.f32.mrb[0].mxu0
  %106 = vmatprep.mubr.f32.mxu0 0.0
  %107 = vmatmul.mubr.f32.gmra.mrb[0].mxu0 %v35
  %v108 = vpop.f32.mrb[0].mxu0
  %v109 = vadd.f32 %v28, %v108
  %v110 = vpop.f32.mrb[0].mxu0
  %111 = vdwg.mxu0
  %vm112 = vcmask 58368
  %v113 = vsel %vm112, %v104, -inf
  %v114 = vrot.slane %v113, 4
  %v115 = vmax.f32 %v113, %v114
  %v116 = vrot.slane %v115, 2
  %v117 = vmax.f32 %v115, %v116
  %v118 = vrot.slane %v117, 1
  %v119 = vmax.f32 %v117, %v118
  %v120 = vsub.f32 %v104, %v119
  %v121 = vmul.f32 %v120, 1.442695
  %v122 = vpow.pop %v121
  %v123 = vsel %vm112, %v122, 0.0
  %v124 = vrot.slane %v123, 4
  %v125 = vadd.f32 %v123, %v124
  %v126 = vrot.slane %v125, 2
  %v127 = vadd.f32 %v125, %v126
  %v128 = vrot.slane %v127, 1
  %v129 = vadd.f32 %v127, %v128
  %v130 = vrcp.pop %v129
  %v131 = vmul.f32 %v122, %v130
  %132 = vst.msk [vmem:[%s3] sm:$0x3] %vm112, %v131
  %v133 = vmul.f32 %v104, 1.442695
  %v134 = vpow.pop %v133
  %v135 = vadd.f32 %v134, 1e-15
  %vm136 = vcmask 62466
  %137 = vst.msk [vmem:[%s3] sm:$0x3c] %vm136, %v135
  %vm138 = vcmask 64518
  %139 = vst.msk [vmem:[%s3] sm:$0xc0] %vm138, %v104
  %140 = vst.msk [vmem:[%s3 + $0x8] sm:$0x3] %vm112, %v109
  // Predicated region
  $region14: #{tpu_custom_call.1} parent=0 // pred_check
    _
  $region15: #{tpu_custom_call.1} parent=0 // pred_check_branch
    %142 = sbr.rel (0) target = $region17
  $region16: #{tpu_custom_call.1} parent=0 // pred_region
    _
  $region17: #{tpu_custom_call.1} parent=0 // pred_fallthru
    _
  // Predicated region
  $region18: #{tpu_custom_call.1} parent=0 // pred_check
    _
  $region19: #{tpu_custom_call.1} parent=0 // pred_check_branch
    %144 = sbr.rel (0) target = $region21
  $region20: #{tpu_custom_call.1} parent=0 // pred_region
    _
  $region21: #{tpu_custom_call.1} parent=0 // pred_fallthru
    _

</llo_original>
